<compile_context>
chip_gen: v7x
topology: tpu7x:2x2x1
jax: 0.10.0
libtpu: 0.0.40
codegen_flags: <defaults>
</compile_context>

<pallas_src>
import functools

import jax
import jax.numpy as jnp
from jax import lax
from jax.experimental import pallas as pl
from jax.experimental.pallas import tpu as pltpu


# --------------------------------------------------------------------------- #
# Kernel: streamed, class-tiled margin head
# --------------------------------------------------------------------------- #
def _margins_kernel(x_ref, w_ref, invn_ref, lab_ref, gt_ref, gts_ref, out_ref, *,
                    fc_type, scale, t, decisive_margin, block_c, num_classes):
    # MXU matmul in the operands' native dtype with f32 accumulation, then
    # normalize with the pre-streamed (1, block_c) inverse column norms.
    cos = jnp.dot(x_ref[...], w_ref[...], preferred_element_type=jnp.float32)
    cos = jnp.clip(cos * invn_ref[...].astype(jnp.float32), -1.0, 1.0)  # (B, TC)

    col0 = pl.program_id(0) * block_c
    cols = col0 + lax.broadcasted_iota(jnp.int32, cos.shape, 1)
    onehot = cols == lab_ref[...]                                       # (B, TC)

    if fc_type == 'DVL':
        gt = gt_ref[...]                                                # (B, 1)
        semi_hard = (cos >= gt - decisive_margin) & (cos <= gt)
        cos = jnp.where(semi_hard, (t + 1.0) * cos + t, cos)

    # Label column <- final_gt (NL/DVL) or gt (Test), precomputed in the wrapper.
    cos = jnp.where(onehot, gts_ref[...], cos)

    if num_classes % block_c != 0:
        # Keep padded lanes of the last tile finite (they are masked on store,
        # but garbage inv_norm could otherwise produce Inf/NaN).
        cos = jnp.where(cols < num_classes, cos, 0.0)

    out_ref[...] = (cos * scale).astype(out_ref.dtype)


# --------------------------------------------------------------------------- #
# Tile-size / VMEM helpers
# --------------------------------------------------------------------------- #
def _vmem_capacity_bytes():
    try:
        return int(pltpu.get_tpu_info().vmem_capacity_bytes)
    except Exception:
        return 64 * 1024 * 1024        # conservative: v7x per-TensorCore VMEM


def _per_col_bytes(B, D, w_bytes, o_bytes):
    # per class column: weight (2 bufs) + inv_norm (2 bufs) + output (2 bufs)
    # + in-kernel f32 cos / int32 cols / bool masks temporaries (~4 x B x 4B).
    return 2 * D * w_bytes + 2 * 4 + 2 * B * o_bytes + 4 * B * 4


def _fixed_bytes(B, D, x_bytes):
    # resident x (count 2 buffers to be safe) + the small (B, 1) inputs.
    return 2 * B * D * x_bytes + 8 * B * 4


def _pick_block_c(B, D, C, x_bytes, w_bytes, o_bytes):
    vmem = _vmem_capacity_bytes()
    budget = int(vmem * 0.70)
    avail = max(budget - _fixed_bytes(B, D, x_bytes), 4 * 1024 * 1024)
    bc = (avail // _per_col_bytes(B, D, w_bytes, o_bytes)) // 128 * 128
    bc = max(128, int(bc))
    if bc >= C:
        # Everything fits in one tile.  For large C still split in two so the
        # "parallel" class axis can feed both v7x TensorCores.
        if C >= 2048:
            bc = pl.cdiv(C, 2 * 128) * 128
        else:
            bc = C
    return bc


# --------------------------------------------------------------------------- #
# Wrapper
# --------------------------------------------------------------------------- #
def margins_forward(x, weight, label, fc_type, scale, t, margin, decisive_margin,
                    *, block_c=None, out_dtype=jnp.float32, inv_norm=None):
    """Pallas equivalent of Margins.forward.

    fc_type and the scalar hyper-parameters are static.  `x` / `weight` are
    streamed in their native dtypes (keep master bf16 weights bf16 to halve the
    weight stream); `out_dtype` controls the logit writeback width.
    `inv_norm` may be passed in if the (1, C) column norms are cached.
    In production wrap this in jax.jit so the gt / inv_norm prologue fuses.
    """
    if fc_type not in ('NL', 'DVL', 'Test'):
        raise ValueError('unknown method!')
    B, D = x.shape
    C = weight.shape[1]

    lab = jnp.where(label.astype(jnp.int32) < 0, C - 1, label.astype(jnp.int32))

    # --- inverse column norms (1, C): identical to F.normalize's max(||w||,1e-12)
    if inv_norm is None:
        wf = weight.astype(jnp.float32)
        inv_norm = lax.rsqrt(
            jnp.maximum(jnp.sum(wf * wf, axis=0, keepdims=True), 1e-24))
    inv_norm = inv_norm.reshape(1, C).astype(jnp.float32)

    # --- gt[b] = clip(<x[b], W[:, lab[b]] / ||W[:, lab[b]]||>, -1, 1): tiny
    #     O(B*D) gather + row-dot, done in plain JAX (no per-row grid kernel).
    w_lab = jnp.take(weight, lab, axis=1).astype(jnp.float32)          # (D, B)
    inv_lab = jnp.take(inv_norm[0], lab)                               # (B,)
    gt = jnp.sum(x.astype(jnp.float32) * w_lab.T, axis=1) * inv_lab
    gt = jnp.clip(gt, -1.0, 1.0).reshape(B, 1)

    # Value stored at the label column (hoisted out of the per-tile kernel).
    if fc_type in ('NL', 'DVL'):
        gt_store = jnp.where(gt > 0, gt - margin, gt)
    else:  # 'Test'
        gt_store = gt

    # --- pick the class tile size / VMEM limit
    x_bytes = jnp.dtype(x.dtype).itemsize
    w_bytes = jnp.dtype(weight.dtype).itemsize
    o_bytes = jnp.dtype(out_dtype).itemsize
    if block_c is None:
        bc = _pick_block_c(B, D, C, x_bytes, w_bytes, o_bytes)
    else:
        bc = int(block_c)
        if bc >= C:
            bc = C
        else:
            bc = max(128, (bc // 128) * 128)
            if bc >= C:
                bc = C

    est = _fixed_bytes(B, D, x_bytes) + bc * _per_col_bytes(B, D, w_bytes, o_bytes)
    vmem_limit = int(min(_vmem_capacity_bytes(),
                         max(2 * est, 32 * 1024 * 1024)))

    kernel = functools.partial(
        _margins_kernel, fc_type=fc_type, scale=float(scale), t=float(t),
        decisive_margin=float(decisive_margin), block_c=bc, num_classes=C)

    return pl.pallas_call(
        kernel,
        out_shape=jax.ShapeDtypeStruct((B, C), out_dtype),
        grid=(pl.cdiv(C, bc),),
        in_specs=[
            pl.BlockSpec((B, D), lambda c: (0, 0)),      # x          (resident)
            pl.BlockSpec((D, bc), lambda c: (0, c)),     # weight     (streamed)
            pl.BlockSpec((1, bc), lambda c: (0, c)),     # 1/||w_c||  (streamed)
            pl.BlockSpec((B, 1), lambda c: (0, 0)),      # labels     (resident)
            pl.BlockSpec((B, 1), lambda c: (0, 0)),      # gt         (resident)
            pl.BlockSpec((B, 1), lambda c: (0, 0)),      # final_gt   (resident)
        ],
        out_specs=pl.BlockSpec((B, bc), lambda c: (0, c)),
        compiler_params=pltpu.CompilerParams(
            dimension_semantics=("parallel",),
            vmem_limit_bytes=vmem_limit),
    )(x, weight, inv_norm, lab.reshape(B, 1), gt, gt_store)


# --------------------------------------------------------------------------- #
# Pure-JAX reference mirroring the PyTorch forward pass
# --------------------------------------------------------------------------- #
def _margins_reference(x, weight, label, fc_type, scale, t, margin, decisive_margin):
    C = weight.shape[1]
    w_n = weight / jnp.maximum(
        jnp.sqrt(jnp.sum(weight * weight, axis=0, keepdims=True)), 1e-12)
    cos = jnp.clip(x @ w_n, -1.0, 1.0)
    lab = jnp.where(label < 0, C - 1, label).astype(jnp.int32)
    gt = cos[jnp.arange(x.shape[0]), lab][:, None]
    onehot = jnp.arange(C)[None, :] == lab[:, None]
    if fc_type == 'NL':
        final_gt = jnp.where(gt > 0, gt - margin, gt)
        out = jnp.where(onehot, final_gt, cos)
    elif fc_type == 'DVL':
        adj = jnp.where((cos >= gt - decisive_margin) & (cos <= gt),
                        (t + 1.0) * cos + t, cos)
        final_gt = jnp.where(gt > 0, gt - margin, gt)
        out = jnp.where(onehot, final_gt, adj)
    else:  # 'Test'
        out = jnp.where(onehot, gt, cos)
    return out * scale, cos, gt, onehot


if __name__ == "__main__":
    B, D, C = 8, 128, 512          # batch, input_features, num classes
    BLOCK_C = 128                  # -> 4 class tiles: exercises the streamed grid

    key = jax.random.PRNGKey(0)
    kx, kw, kl = jax.random.split(key, 3)

    # kaiming_normal_ on weight.t() -> std = sqrt(2 / D)
    weight = jax.random.normal(kw, (D, C), dtype=jnp.float32) * jnp.sqrt(2.0 / D)

    # L2-normalized embeddings (typical input to margin heads)
    x = jax.random.normal(kx, (B, D), dtype=jnp.float32)
    x = x / jnp.linalg.norm(x, axis=1, keepdims=True)

    # Labels in [0, C); one negative label exercises the label<0 -> C-1 path.
    label = jax.random.randint(kl, (B,), 0, C, dtype=jnp.int32)
    label = label.at[3].set(-1)

    scale, t, margin, decisive_margin = 30.0, 0.2, 0.35, 0.1

    ok = True
    for in_dtype in (jnp.float32, jnp.bfloat16):
        # Simulate persistently-stored bf16 weights/activations by casting the
        # inputs up front (no wrapper-side cast inside margins_forward).
        x_in = x.astype(in_dtype)
        w_in = weight.astype(in_dtype)
        # Reference uses inputs rounded to the same dtype so the comparison is
        # apples-to-apples (matmul accumulation and margin math are f32 in both).
        x_r = x_in.astype(jnp.float32)
        w_r = w_in.astype(jnp.float32)
        for fc_type in ('NL', 'DVL', 'Test'):
            out = margins_forward(x_in, w_in, label, fc_type, scale, t, margin,
                                  decisive_margin, block_c=BLOCK_C,
                                  out_dtype=jnp.float32)
            out = jax.block_until_ready(out)
            ref, cos_r, gt_r, onehot = _margins_reference(
                x_r, w_r, label, fc_type, scale, t, margin, decisive_margin)

            # Elements sitting exactly on a branch boundary are excluded: there
            # the output is legitimately discontinuous and MXU/XLA accumulation
            # order differences may flip the branch.
            stable = jnp.ones(ref.shape, dtype=bool)
            if fc_type == 'DVL':
                stable &= jnp.abs(cos_r - (gt_r - decisive_margin)) > 1e-3
                stable &= (jnp.abs(cos_r - gt_r) > 1e-3) | onehot
            if fc_type in ('NL', 'DVL'):
                stable &= ~(onehot & (jnp.abs(gt_r) < 1e-3))

            err = float(jnp.max(jnp.where(stable, jnp.abs(out - ref), 0.0)))
            if err > 5e-2:
                ok = False
                print(f"MISMATCH fc_type={fc_type} "
                      f"dtype={jnp.dtype(in_dtype).name} max_err={err:.3e}")

    if ok:
        print("KERNEL_OK")
</pallas_src>

<mosaic_0001>
module attributes {stable_mosaic.version = 11 : i64} {
  func.func @_margins_kernel(%arg0: i32, %arg1: memref<8x128xf32, #tpu.memory_space<vmem>>, %arg2: memref<128x128xf32, #tpu.memory_space<vmem>>, %arg3: memref<1x128xf32, #tpu.memory_space<vmem>>, %arg4: memref<8x1xi32, #tpu.memory_space<vmem>>, %arg5: memref<8x1xf32, #tpu.memory_space<vmem>>, %arg6: memref<8x1xf32, #tpu.memory_space<vmem>>, %arg7: memref<8x128xf32, #tpu.memory_space<vmem>>) attributes {dimension_semantics = [#tpu.dimension_semantics<parallel>], iteration_bounds = array<i64: 4>, scalar_prefetch = 0 : i64, scratch_operands = 0 : i64, tpu.core_type = #tpu.core_type<tc>, window_params = [{pipeline_mode = #tpu.pipeline_mode<synchronous>, transform_indices = @transform_0, window_bounds = array<i64: 8, 128>}, {transform_indices = @transform_1, window_bounds = array<i64: 128, 128>}, {transform_indices = @transform_2, window_bounds = array<i64: 1, 128>}, {pipeline_mode = #tpu.pipeline_mode<synchronous>, transform_indices = @transform_3, window_bounds = array<i64: 8, 1>}, {pipeline_mode = #tpu.pipeline_mode<synchronous>, transform_indices = @transform_4, window_bounds = array<i64: 8, 1>}, {pipeline_mode = #tpu.pipeline_mode<synchronous>, transform_indices = @transform_5, window_bounds = array<i64: 8, 1>}, {transform_indices = @transform_6, window_bounds = array<i64: 8, 128>}]} {
    %c0 = arith.constant 0 : index
    %c0_0 = arith.constant 0 : index
    %0 = vector.load %arg1[%c0, %c0_0] : memref<8x128xf32, #tpu.memory_space<vmem>>, vector<8x128xf32>
    %c0_1 = arith.constant 0 : index
    %c0_2 = arith.constant 0 : index
    %1 = vector.load %arg2[%c0_1, %c0_2] : memref<128x128xf32, #tpu.memory_space<vmem>>, vector<128x128xf32>
    %cst = arith.constant dense<0.000000e+00> : vector<8x128xf32>
    %2 = tpu.matmul %0, %1, %cst {dimension_numbers = #tpu.dot_dimension_numbers<[1], [0], [0], [1], [0, 0, 1, 1], [], []>} : vector<8x128xf32>, vector<128x128xf32>, vector<8x128xf32> -> vector<8x128xf32>
    %c0_3 = arith.constant 0 : index
    %c0_4 = arith.constant 0 : index
    %3 = vector.load %arg3[%c0_3, %c0_4] : memref<1x128xf32, #tpu.memory_space<vmem>>, vector<1x128xf32>
    %4 = vector.broadcast %3 : vector<1x128xf32> to vector<8x128xf32>
    %5 = arith.mulf %2, %4 : vector<8x128xf32>
    %cst_5 = arith.constant -1.000000e+00 : f32
    %cst_6 = arith.constant 1.000000e+00 : f32
    %6 = vector.broadcast %cst_5 : f32 to vector<8x128xf32>
    %7 = arith.maximumf %6, %5 : vector<8x128xf32>
    %8 = vector.broadcast %cst_6 : f32 to vector<8x128xf32>
    %9 = arith.minimumf %8, %7 : vector<8x128xf32>
    %c128_i32 = arith.constant 128 : i32
    %10 = arith.muli %arg0, %c128_i32 : i32
    %11 = tpu.iota {dimensions = array<i32: 1>} : vector<8x128xi32>
    %12 = vector.broadcast %10 : i32 to vector<8x128xi32>
    %13 = arith.addi %12, %11 : vector<8x128xi32>
    %c0_7 = arith.constant 0 : index
    %c0_8 = arith.constant 0 : index
    %14 = vector.load %arg4[%c0_7, %c0_8] : memref<8x1xi32, #tpu.memory_space<vmem>>, vector<8x1xi32>
    %15 = vector.broadcast %14 : vector<8x1xi32> to vector<8x128xi32>
    %16 = arith.cmpi eq, %13, %15 : vector<8x128xi32>
    %c0_9 = arith.constant 0 : index
    %c0_10 = arith.constant 0 : index
    %17 = vector.load %arg6[%c0_9, %c0_10] : memref<8x1xf32, #tpu.memory_space<vmem>>, vector<8x1xf32>
    %18 = vector.shape_cast %17 : vector<8x1xf32> to vector<8x1xf32>
    %19 = vector.broadcast %18 : vector<8x1xf32> to vector<8x128xf32>
    %20 = arith.select %16, %19, %9 : vector<8x128xi1>, vector<8x128xf32>
    %cst_11 = arith.constant 3.000000e+01 : f32
    %21 = vector.broadcast %cst_11 : f32 to vector<8x128xf32>
    %22 = arith.mulf %20, %21 : vector<8x128xf32>
    %c0_12 = arith.constant 0 : index
    %c0_13 = arith.constant 0 : index
    %23 = vector.load %arg7[%c0_12, %c0_13] : memref<8x128xf32, #tpu.memory_space<vmem>>, vector<8x128xf32>
    tpu.vector_store %arg7[%c0_12, %c0_13], %22 {strides = array<i32>} : memref<8x128xf32, #tpu.memory_space<vmem>>, vector<8x128xf32>,
    return
  }
  func.func @transform_0(%arg0: i32) -> (i32, i32) {
    %c0_i32 = arith.constant 0 : i32
    %c0_i32_0 = arith.constant 0 : i32
    %c0_i32_1 = arith.constant 0 : i32
    return %c0_i32, %c0_i32_0 : i32, i32
  }
  func.func @transform_1(%arg0: i32) -> (i32, i32) {
    %c0_i32 = arith.constant 0 : i32
    %c0_i32_0 = arith.constant 0 : i32
    return %c0_i32, %arg0 : i32, i32
  }
  func.func @transform_2(%arg0: i32) -> (i32, i32) {
    %c0_i32 = arith.constant 0 : i32
    %c0_i32_0 = arith.constant 0 : i32
    return %c0_i32, %arg0 : i32, i32
  }
  func.func @transform_3(%arg0: i32) -> (i32, i32) {
    %c0_i32 = arith.constant 0 : i32
    %c0_i32_0 = arith.constant 0 : i32
    %c0_i32_1 = arith.constant 0 : i32
    return %c0_i32, %c0_i32_0 : i32, i32
  }
  func.func @transform_4(%arg0: i32) -> (i32, i32) {
    %c0_i32 = arith.constant 0 : i32
    %c0_i32_0 = arith.constant 0 : i32
    %c0_i32_1 = arith.constant 0 : i32
    return %c0_i32, %c0_i32_0 : i32, i32
  }
  func.func @transform_5(%arg0: i32) -> (i32, i32) {
    %c0_i32 = arith.constant 0 : i32
    %c0_i32_0 = arith.constant 0 : i32
    %c0_i32_1 = arith.constant 0 : i32
    return %c0_i32, %c0_i32_0 : i32, i32
  }
  func.func @transform_6(%arg0: i32) -> (i32, i32) {
    %c0_i32 = arith.constant 0 : i32
    %c0_i32_0 = arith.constant 0 : i32
    return %c0_i32, %arg0 : i32, i32
  }
}

</mosaic_0001>

<llo_original>
// kernel: tpu_custom_call.1
$region0: #{tpu_custom_call.1}
  #allocation0 [shape = 'u32[]', space=smem, size = 0x4, offset = 0x4, fixed_abs, tag = 'smem constant byte address 0x4 - core index']
  #allocation1 [shape = 'u32[144,128]{1,0:T(1,128)}', space=vmem, size = 0x12000, scoped, tag = 'internal scratch']
  %s0 = inlined_call_operand.vmem [shape: f32[8,128], index: 0, kind: input, shape index: {}]
  %s1 = inlined_call_operand.hbm [shape: f32[128,512], index: 1, kind: input, shape index: {}]
  %s2 = inlined_call_operand.vmem [shape: f32[1,512], index: 2, kind: input, shape index: {}]
  %s3 = inlined_call_operand.vmem [shape: s32[8,1], index: 3, kind: input, shape index: {}]
  %s4 = inlined_call_operand.vmem [shape: f32[8,1], index: 4, kind: input, shape index: {}]
  %s5 = inlined_call_operand.vmem [shape: f32[8,1], index: 5, kind: input, shape index: {}]
  %s6 = inlined_call_operand.hbm [shape: f32[8,512], index: 6, kind: output, shape index: {}]
  %s7 = sld [smem:[#allocation0]]
  $region61: #{tpu_custom_call.1} parent=0
    _
  %s9 = ssub.s32 1, %s7
  %s10 = scalar_select 0, %s9, %s7
  $region1: #{tpu_custom_call.1} parent=0
    #allocation2 [shape = 'u8[131072]{0}', space=vmem, size = 0x20000, scoped, tag = 'input window, operand 1']
    #allocation3 [shape = 's32[2]{0}', space=sflag, size = 0x8, scoped, tag = 'scoped memory for tpu_custom_call.1']
    #allocation4 [shape = 's32[2]{0}', space=sflag, size = 0x8, scoped, tag = 'scoped memory for tpu_custom_call.1']
    #allocation5 [shape = 'u8[8192]{0}', space=vmem, size = 0x2000, scoped, tag = 'output window, operand 0']
    %11 = vsyncpa [#allocation3], 0
    %s12 = scalar_lea.sflag [#allocation3], 1
    %13 = vsyncpa %s12, 0
    %14 = vsyncpa [#allocation4], 0
    %s15 = scalar_lea.sflag [#allocation4], 1
    %16 = vsyncpa %s15, 0
    loop: start=0, step=1, limit=6
    $region2: #{tpu_custom_call.1} parent=1 // loop_pre_header
      _
    $region3: #{tpu_custom_call.1} parent=1 // loop_header
      %s18 = sphi 0, %s22
      %p19 = scmp.ge.s32.totalorder %s18, 6
      %s26 = sphi 0, %s26
      %s28 = sphi 0, %s26
      %s29 = sphi 0, %s28
      %s43 = sphi 0, %s29
      %s49 = sphi 0, %s51
      %s52 = sphi 0, %s49
      %s53 = sphi 0, %s52
      %s69 = sphi 0, %s53
      %s75 = sphi 0, %s77
      %s78 = sphi 0, %s75
      %s79 = sphi 0, %s78
      %s95 = sphi 0, %s79
      %s99 = sphi 0, %s99
      %s101 = sphi 0, %s99
      %s102 = sphi 0, %s101
      %s116 = sphi 0, %s102
      %s120 = sphi 0, %s120
      %s122 = sphi 0, %s120
      %s123 = sphi 0, %s122
      %s137 = sphi 0, %s123
      %s141 = sphi 0, %s141
      %s143 = sphi 0, %s141
      %s144 = sphi 0, %s143
      %s158 = sphi 0, %s144
      %s164 = sphi 0, %s166
      %s167 = sphi 0, %s164
      %s168 = sphi 0, %s167
      %s184 = sphi 0, %s168
    $region4: #{tpu_custom_call.1} parent=1 // loop_header_branch
      %21 = sbr.rel (%p19) target = $region8
    $region5: #{tpu_custom_call.1} parent=1 // loop_body
      %s23 = ssub.s32 %s18, 1
      %s24 = ssub.s32 %s18, 2
      %s25 = sadd.s32 %s18, 1
      %s27 = sadd.s32 %s26, 1
      %p30 = scmp.eq.s32.totalorder %s18, 3
      %p31 = scmp.ne.s32.totalorder %s26, %s28
      %p32 = scmp.eq.s32.totalorder %s18, 0
      %p33 = por %p31, %p32
      %p34 = scmp.ne.s32.totalorder %s26, %s28
      %p35 = scmp.eq.s32.totalorder %s23, 3
      %p36 = por %p34, %p35
      %p37 = scmp.ne.s32.totalorder %s28, %s29
      %p38 = scmp.eq.s32.totalorder %s23, 0
      %p39 = por %p37, %p38
      %p40 = scmp.ne.s32.totalorder %s28, %s29
      %p41 = scmp.eq.s32.totalorder %s24, 3
      %p42 = por %p40, %p41
      %p44 = scmp.ne.s32.totalorder %s29, %s43
      %p45 = scmp.eq.s32.totalorder %s24, 0
      %p46 = por %p44, %p45
      %s47 = ssub.s32 %s18, %s25
      %p48 = scmp.eq.s32.totalorder %s47, 0
      %s50 = sadd.s32 %s49, 1
      %s51 = scalar_select %p48, %s49, %s50
      %p54 = pneg %p48
      %p55 = scmp.eq.s32.totalorder %s18, 3
      %p56 = por %p54, %p55
      %p57 = scmp.ne.s32.totalorder %s49, %s52
      %p58 = scmp.eq.s32.totalorder %s18, 0
      %p59 = por %p57, %p58
      %p60 = scmp.ne.s32.totalorder %s49, %s52
      %p61 = scmp.eq.s32.totalorder %s23, 3
      %p62 = por %p60, %p61
      %p63 = scmp.ne.s32.totalorder %s52, %s53
      %p64 = scmp.eq.s32.totalorder %s23, 0
      %p65 = por %p63, %p64
      %p66 = scmp.ne.s32.totalorder %s52, %s53
      %p67 = scmp.eq.s32.totalorder %s24, 3
      %p68 = por %p66, %p67
      %p70 = scmp.ne.s32.totalorder %s53, %s69
      %p71 = scmp.eq.s32.totalorder %s24, 0
      %p72 = por %p70, %p71
      %s73 = ssub.s32 %s18, %s25
      %p74 = scmp.eq.s32.totalorder %s73, 0
      %s76 = sadd.s32 %s75, 1
      %s77 = scalar_select %p74, %s75, %s76
      %p80 = pneg %p74
      %p81 = scmp.eq.s32.totalorder %s18, 3
      %p82 = por %p80, %p81
      %p83 = scmp.ne.s32.totalorder %s75, %s78
      %p84 = scmp.eq.s32.totalorder %s18, 0
      %p85 = por %p83, %p84
      %p86 = scmp.ne.s32.totalorder %s75, %s78
      %p87 = scmp.eq.s32.totalorder %s23, 3
      %p88 = por %p86, %p87
      %p89 = scmp.ne.s32.totalorder %s78, %s79
      %p90 = scmp.eq.s32.totalorder %s23, 0
      %p91 = por %p89, %p90
      %p92 = scmp.ne.s32.totalorder %s78, %s79
      %p93 = scmp.eq.s32.totalorder %s24, 3
      %p94 = por %p92, %p93
      %p96 = scmp.ne.s32.totalorder %s79, %s95
      %p97 = scmp.eq.s32.totalorder %s24, 0
      %p98 = por %p96, %p97
      %s100 = sadd.s32 %s99, 1
      %p103 = scmp.eq.s32.totalorder %s18, 3
      %p104 = scmp.ne.s32.totalorder %s99, %s101
      %p105 = scmp.eq.s32.totalorder %s18, 0
      %p106 = por %p104, %p105
      %p107 = scmp.ne.s32.totalorder %s99, %s101
      %p108 = scmp.eq.s32.totalorder %s23, 3
      %p109 = por %p107, %p108
      %p110 = scmp.ne.s32.totalorder %s101, %s102
      %p111 = scmp.eq.s32.totalorder %s23, 0
      %p112 = por %p110, %p111
      %p113 = scmp.ne.s32.totalorder %s101, %s102
      %p114 = scmp.eq.s32.totalorder %s24, 3
      %p115 = por %p113, %p114
      %p117 = scmp.ne.s32.totalorder %s102, %s116
      %p118 = scmp.eq.s32.totalorder %s24, 0
      %p119 = por %p117, %p118
      %s121 = sadd.s32 %s120, 1
      %p124 = scmp.eq.s32.totalorder %s18, 3
      %p125 = scmp.ne.s32.totalorder %s120, %s122
      %p126 = scmp.eq.s32.totalorder %s18, 0
      %p127 = por %p125, %p126
      %p128 = scmp.ne.s32.totalorder %s120, %s122
      %p129 = scmp.eq.s32.totalorder %s23, 3
      %p130 = por %p128, %p129
      %p131 = scmp.ne.s32.totalorder %s122, %s123
      %p132 = scmp.eq.s32.totalorder %s23, 0
      %p133 = por %p131, %p132
      %p134 = scmp.ne.s32.totalorder %s122, %s123
      %p135 = scmp.eq.s32.totalorder %s24, 3
      %p136 = por %p134, %p135
      %p138 = scmp.ne.s32.totalorder %s123, %s137
      %p139 = scmp.eq.s32.totalorder %s24, 0
      %p140 = por %p138, %p139
      %s142 = sadd.s32 %s141, 1
      %p145 = scmp.eq.s32.totalorder %s18, 3
      %p146 = scmp.ne.s32.totalorder %s141, %s143
      %p147 = scmp.eq.s32.totalorder %s18, 0
      %p148 = por %p146, %p147
      %p149 = scmp.ne.s32.totalorder %s141, %s143
      %p150 = scmp.eq.s32.totalorder %s23, 3
      %p151 = por %p149, %p150
      %p152 = scmp.ne.s32.totalorder %s143, %s144
      %p153 = scmp.eq.s32.totalorder %s23, 0
      %p154 = por %p152, %p153
      %p155 = scmp.ne.s32.totalorder %s143, %s144
      %p156 = scmp.eq.s32.totalorder %s24, 3
      %p157 = por %p155, %p156
      %p159 = scmp.ne.s32.totalorder %s144, %s158
      %p160 = scmp.eq.s32.totalorder %s24, 0
      %p161 = por %p159, %p160
      %s162 = ssub.s32 %s18, %s25
      %p163 = scmp.eq.s32.totalorder %s162, 0
      %s165 = sadd.s32 %s164, 1
      %s166 = scalar_select %p163, %s164, %s165
      %p169 = pneg %p163
      %p170 = scmp.eq.s32.totalorder %s18, 3
      %p171 = por %p169, %p170
      %p172 = scmp.ne.s32.totalorder %s164, %s167
      %p173 = scmp.eq.s32.totalorder %s18, 0
      %p174 = por %p172, %p173
      %p175 = scmp.ne.s32.totalorder %s164, %s167
      %p176 = scmp.eq.s32.totalorder %s23, 3
      %p177 = por %p175, %p176
      %p178 = scmp.ne.s32.totalorder %s167, %s168
      %p179 = scmp.eq.s32.totalorder %s23, 0
      %p180 = por %p178, %p179
      %p181 = scmp.ne.s32.totalorder %s167, %s168
      %p182 = scmp.eq.s32.totalorder %s24, 3
      %p183 = por %p181, %p182
      %p185 = scmp.ne.s32.totalorder %s168, %s184
      %p186 = scmp.eq.s32.totalorder %s24, 0
      %p187 = por %p185, %p186
      %p188 = scmp.le.s32.totalorder 1, %s18
      %p189 = scmp.lt.s32.totalorder %s18, 5
      %p190 = pnand %p188, %p189
      %p191 = pneg %p190
      // Predicated region
      $region9: #{tpu_custom_call.1} parent=5 // pred_check
        _
      $region10: #{tpu_custom_call.1} parent=5 // pred_check_branch
        %193 = sbr.rel (%p190) target = $region12
      $region11: #{tpu_custom_call.1} parent=5 // pred_region
        %s194 = ssub.s32 %s18, 1
        // Predicated region
        $region13: #{tpu_custom_call.1} parent=11 // pred_check
          %p195 = pneg %p39
        $region14: #{tpu_custom_call.1} parent=11 // pred_check_branch
          %197 = sbr.rel (%p195) target = $region16
        $region15: #{tpu_custom_call.1} parent=11 // pred_region
          _
        $region16: #{tpu_custom_call.1} parent=11 // pred_fallthru
          _
        // Predicated region
        $region17: #{tpu_custom_call.1} parent=11 // pred_check
          %p198 = pneg %p112
        $region18: #{tpu_custom_call.1} parent=11 // pred_check_branch
          %200 = sbr.rel (%p198) target = $region20
        $region19: #{tpu_custom_call.1} parent=11 // pred_region
          _
        $region20: #{tpu_custom_call.1} parent=11 // pred_fallthru
          _
        // Predicated region
        $region21: #{tpu_custom_call.1} parent=11 // pred_check
          %p201 = pneg %p133
        $region22: #{tpu_custom_call.1} parent=11 // pred_check_branch
          %203 = sbr.rel (%p201) target = $region24
        $region23: #{tpu_custom_call.1} parent=11 // pred_region
          _
        $region24: #{tpu_custom_call.1} parent=11 // pred_fallthru
          _
        // Predicated region
        $region25: #{tpu_custom_call.1} parent=11 // pred_check
          %p204 = pneg %p154
        $region26: #{tpu_custom_call.1} parent=11 // pred_check_branch
          %206 = sbr.rel (%p204) target = $region28
        $region27: #{tpu_custom_call.1} parent=11 // pred_region
          _
        $region28: #{tpu_custom_call.1} parent=11 // pred_fallthru
          _
      $region12: #{tpu_custom_call.1} parent=5 // pred_fallthru
        _
      %p207 = scmp.lt.s32.totalorder %s18, 4
      // Predicated region
      $region29: #{tpu_custom_call.1} parent=5 // pred_check
        %p208 = pneg %p207
      $region30: #{tpu_custom_call.1} parent=5 // pred_check_branch
        %210 = sbr.rel (%p208) target = $region32
      $region31: #{tpu_custom_call.1} parent=5 // pred_region
        // Predicated region
        $region33: #{tpu_custom_call.1} parent=31 // pred_check
          %p211 = pneg %p59
        $region34: #{tpu_custom_call.1} parent=31 // pred_check_branch
          %213 = sbr.rel (%p211) target = $region36
        $region35: #{tpu_custom_call.1} parent=31 // pred_region
          %s214 = sand.u32 %s49, 1
          %s215 = scalar_lea.sflag [#allocation3], %s214
          %s216 = sand.u32 %s49, 1
          %s217 = smul.addr %s216, 128
          %s218 = scalar_lea.vmem [#allocation2], %s217
          %s220 = ssub.s32 2048, 2048
          %221 = vsyncadd %s215, %s220
          %s222 = smul.addr %s18, 128
          %s223 = scalar_lea.hbm %s1, %s222
          %s224 = sshll.u32 %s218, 4
          %s225 = int_to_ptr.vmem [resolvable:$true] %s224
          %230 = dma.hbm_to_vmem [thread:$0]  %s223, 2048, %s225, %s215, 512, 128, 8
        $region36: #{tpu_custom_call.1} parent=31 // pred_fallthru
          _
        // Predicated region
        $region37: #{tpu_custom_call.1} parent=31 // pred_check
          %p231 = pneg %p85
        $region38: #{tpu_custom_call.1} parent=31 // pred_check_branch
          %233 = sbr.rel (%p231) target = $region40
        $region39: #{tpu_custom_call.1} parent=31 // pred_region
          %p234 = scmp.lt.s32.totalorder %s18, 3
          %s235 = scalar_select %p234, %s18, 3
          %s236 = scalar_lea.vmem %s2, %s235
        $region40: #{tpu_custom_call.1} parent=31 // pred_fallthru
          _
      $region32: #{tpu_custom_call.1} parent=5 // pred_fallthru
        _
      %p237 = scmp.le.s32.totalorder 1, %s18
      %p238 = scmp.lt.s32.totalorder %s18, 5
      %p239 = pnand %p237, %p238
      %p240 = pneg %p239
      // Predicated region
      $region41: #{tpu_custom_call.1} parent=5 // pred_check
        _
      $region42: #{tpu_custom_call.1} parent=5 // pred_check_branch
        %242 = sbr.rel (%p239) target = $region44
      $region43: #{tpu_custom_call.1} parent=5 // pred_region
        %s243 = ssub.s32 %s18, 1
        %s244 = sand.u32 %s52, 1
        %s245 = scalar_lea.sflag [#allocation3], %s244
        %s246 = sand.u32 %s52, 1
        %s247 = smul.addr %s246, 128
        %s248 = scalar_lea.vmem [#allocation2], %s247
        // Predicated region
        $region45: #{tpu_custom_call.1} parent=43 // pred_check
          %p249 = pneg %p65
        $region46: #{tpu_custom_call.1} parent=43 // pred_check_branch
          %251 = sbr.rel (%p249) target = $region48
        $region47: #{tpu_custom_call.1} parent=43 // pred_region
          %252 = dma.done %s245, 2048
        $region48: #{tpu_custom_call.1} parent=43 // pred_fallthru
          _
        %p253 = pneg %p39
        %p254 = pneg %p36
        %s255 = sand.u32 %s52, 1
        %s256 = scalar_lea.sflag [#allocation3], %s255
        %s257 = sand.u32 %s52, 1
        %s258 = smul.addr %s257, 128
        %s259 = scalar_lea.vmem [#allocation2], %s258
        %p260 = pneg %p65
        %p261 = pneg %p62
        %p262 = scmp.lt.s32.totalorder %s23, 3
        %s263 = scalar_select %p262, %s23, 3
        %s264 = scalar_lea.vmem %s2, %s263
        %p265 = pneg %p91
        %p266 = pneg %p88
        %p267 = pneg %p112
        %p268 = pneg %p109
        %p269 = pneg %p133
        %p270 = pneg %p130
        %p271 = pneg %p154
        %p272 = pneg %p151
        %p273 = pneg %p180
        %p274 = pneg %p177
        %s275 = sand.u32 %s167, 1
        %s276 = scalar_lea.sflag [#allocation4], %s275
        %s277 = sand.u32 %s167, 1
        %s278 = smul.addr %s277, 8
        %s279 = scalar_lea.vmem [#allocation5], %s278
        %p280 = scmp.lt.s32.totalorder %s23, 3
        %s281 = scalar_select %p280, %s23, 3
        %s282 = scalar_lea.vmem %s2, %s281
        %v283 = vld [vmem:[%s0] sm:$0xff]
        %v284 = vld [vmem:[%s248] sm:$0xff]
        %v285 = vld [vmem:[%s248 + $0x8] sm:$0xff]
        %v286 = vld [vmem:[%s248 + $0x10] sm:$0xff]
        %v287 = vld [vmem:[%s248 + $0x18] sm:$0xff]
        %v288 = vld [vmem:[%s248 + $0x20] sm:$0xff]
        %v289 = vld [vmem:[%s248 + $0x28] sm:$0xff]
        %v290 = vld [vmem:[%s248 + $0x30] sm:$0xff]
        %v291 = vld [vmem:[%s248 + $0x38] sm:$0xff]
        %v292 = vld [vmem:[%s248 + $0x40] sm:$0xff]
        %v293 = vld [vmem:[%s248 + $0x48] sm:$0xff]
        %v294 = vld [vmem:[%s248 + $0x50] sm:$0xff]
        %v295 = vld [vmem:[%s248 + $0x58] sm:$0xff]
        %v296 = vld [vmem:[%s248 + $0x60] sm:$0xff]
        %v297 = vld [vmem:[%s248 + $0x68] sm:$0xff]
        %v298 = vld [vmem:[%s248 + $0x70] sm:$0xff]
        %v299 = vld [vmem:[%s248 + $0x78] sm:$0xff]
        %300 = vmatprep.subr.mxu0 0.0
        %301 = vmatpush1.msra.mxu0 %v284
        %302 = vmatprep.subr.mxu0 0.0
        %303 = vmatpush1.msra.mxu0 %v285
        %304 = vmatprep.subr.mxu0 0.0
        %305 = vmatpush1.msra.mxu0 %v286
        %306 = vmatprep.subr.mxu0 0.0
        %307 = vmatpush1.msra.mxu0 %v287
        %308 = vmatprep.subr.mxu0 0.0
        %309 = vmatpush1.msra.mxu0 %v288
        %310 = vmatprep.subr.mxu0 0.0
        %311 = vmatpush1.msra.mxu0 %v289
        %312 = vmatprep.subr.mxu0 0.0
        %313 = vmatpush1.msra.mxu0 %v290
        %314 = vmatprep.subr.mxu0 0.0
        %315 = vmatpush1.msra.mxu0 %v291
        %316 = vmatprep.subr.mxu0 0.0
        %317 = vmatpush1.msra.mxu0 %v292
        %318 = vmatprep.subr.mxu0 0.0
        %319 = vmatpush1.msra.mxu0 %v293
        %320 = vmatprep.subr.mxu0 0.0
        %321 = vmatpush1.msra.mxu0 %v294
        %322 = vmatprep.subr.mxu0 0.0
        %323 = vmatpush1.msra.mxu0 %v295
        %324 = vmatprep.subr.mxu0 0.0
        %325 = vmatpush1.msra.mxu0 %v296
        %326 = vmatprep.subr.mxu0 0.0
        %327 = vmatpush1.msra.mxu0 %v297
        %328 = vmatprep.subr.mxu0 0.0
        %329 = vmatpush1.msra.mxu0 %v298
        %330 = vmatprep.subr.mxu0 0.0
        %331 = vmatpush1.msra.mxu0 %v299
        %332 = vmatprep.subr.mxu0 0.0
        %333 = vmatpush1.msra.mxu0 0.0
        %334 = vmatprep.subr.mxu0 0.0
        %335 = vmatpush1.msra.mxu0 0.0
        %336 = vmatprep.subr.mxu0 0.0
        %337 = vmatpush1.msra.mxu0 0.0
        %338 = vmatprep.subr.mxu0 0.0
        %339 = vmatpush1.msra.mxu0 0.0
        %340 = vmatprep.subr.mxu0 0.0
        %341 = vmatpush1.msra.mxu0 0.0
        %342 = vmatprep.subr.mxu0 0.0
        %343 = vmatpush1.msra.mxu0 0.0
        %344 = vmatprep.subr.mxu0 0.0
        %345 = vmatpush1.msra.mxu0 0.0
        %346 = vmatprep.subr.mxu0 0.0
        %347 = vmatpush1.msra.mxu0 0.0
        %348 = vmatprep.subr.mxu0 0.0
        %349 = vmatpush1.msra.mxu0 0.0
        %350 = vmatprep.subr.mxu0 0.0
        %351 = vmatpush1.msra.mxu0 0.0
        %352 = vmatprep.subr.mxu0 0.0
        %353 = vmatpush1.msra.mxu0 0.0
        %354 = vmatprep.subr.mxu0 0.0
        %355 = vmatpush1.msra.mxu0 0.0
        %356 = vmatprep.subr.mxu0 0.0
        %357 = vmatpush1.msra.mxu0 0.0
        %358 = vmatprep.subr.mxu0 0.0
        %359 = vmatpush1.msra.mxu0 0.0
        %360 = vmatprep.subr.mxu0 0.0
        %361 = vmatpush1.msra.mxu0 0.0
        %362 = vmatprep.subr.mxu0 0.0
        %363 = vmatpush1.msra.mxu0 0.0
        %364 = vmatprep.mubr.f32.mxu0 0.0
        %365 = vmatmul.mubr.f32.gmra.mrb[0].mxu0 %v283
        %v366 = vpop.f32.mrb[0].mxu0
        %v367 = vadd.f32 0.0, %v366
        %v368 = vpop.f32.mrb[0].mxu0
        %369 = vdwg.mxu0
        %v370 = vld [vmem:[%s282] sm:$0x1]
        %v372 = vlaneseq
        %v373 = vshrl.u32 %v372, 7
        %v374 = vsub.s32 0, %v373
        %v375 = vrot.slane %v370, %v374
        %v377 = vmul.f32 %v367, %v375
        %v378 = vmax.f32 %v377, -1.0
        %v379 = vmin.f32 %v378, 1.0
        %s380 = smul.u32 %s23, 128
        %v381 = vlaneseq
        %v382 = vand.u32 %v381, 127
        %v383 = vstv %s380
        %v384 = vadd.s32 %v383, %v382
        %v385 = vld [vmem:[%s3] sm:$0xff]
        %386 = vset.pattern.permute.xlu0 0
        %387 = vperm.xlu0 %386, %v385
        %v388 = vpop.permute.xlu0 %387
        %vm389 = vcmp.eq.s32.totalorder %v384, %v388
        %v390 = vld [vmem:[%s5] sm:$0xff]
        %392 = vset.pattern.permute.xlu0 0
        %393 = vperm.xlu0 %392, %v390
        %v394 = vpop.permute.xlu0 %393
        %v396 = vsel %vm389, %v394, %v379
        %v397 = vmul.f32 %v396, 30.0
        %398 = vst [vmem:[%s279] sm:$0xff] %v397
        %s399 = sand.u32 %s167, 1
        %s400 = scalar_lea.sflag [#allocation4], %s399
        %s401 = sand.u32 %s167, 1
        %s402 = smul.addr %s401, 8
        %s403 = scalar_lea.vmem [#allocation5], %s402
        // Predicated region
        $region49: #{tpu_custom_call.1} parent=43 // pred_check
          %p404 = pneg %p177
        $region50: #{tpu_custom_call.1} parent=43 // pred_check_branch
          %406 = sbr.rel (%p404) target = $region52
        $region51: #{tpu_custom_call.1} parent=43 // pred_region
          %s408 = ssub.s32 128, 128
          %409 = vsyncadd %s400, %s408
          %s410 = smul.addr %s23, 128
          %s411 = scalar_lea.hbm %s6, %s410
          %s413 = sshll.u32 %s403, 4
          %s414 = int_to_ptr.vmem [resolvable:$true] %s413
          %416 = dma.vmem_to_hbm [thread:$0]  %s414, 128, %s411, %s400
        $region52: #{tpu_custom_call.1} parent=43 // pred_fallthru
          _
      $region44: #{tpu_custom_call.1} parent=5 // pred_fallthru
        _
      %p417 = scmp.le.s32.totalorder 2, %s18
      // Predicated region
      $region53: #{tpu_custom_call.1} parent=5 // pred_check
        %p418 = pneg %p417
      $region54: #{tpu_custom_call.1} parent=5 // pred_check_branch
        %420 = sbr.rel (%p418) target = $region56
      $region55: #{tpu_custom_call.1} parent=5 // pred_region
        %s421 = ssub.s32 %s18, 2
        // Predicated region
        $region57: #{tpu_custom_call.1} parent=55 // pred_check
          %p422 = pneg %p183
        $region58: #{tpu_custom_call.1} parent=55 // pred_check_branch
          %424 = sbr.rel (%p422) target = $region60
        $region59: #{tpu_custom_call.1} parent=55 // pred_region
          %s425 = sand.u32 %s168, 1
          %s426 = scalar_lea.sflag [#allocation4], %s425
          %s427 = sand.u32 %s168, 1
          %s428 = smul.addr %s427, 8
          %s429 = scalar_lea.vmem [#allocation5], %s428
          %430 = dma.done %s426, 128
        $region60: #{tpu_custom_call.1} parent=55 // pred_fallthru
          _
      $region56: #{tpu_custom_call.1} parent=5 // pred_fallthru
        _
    $region6: #{tpu_custom_call.1} parent=1 // loop_footer
      %s22 = sadd.s32 1, %s18
    $region7: #{tpu_custom_call.1} parent=1 // loop_footer_branch
      %17 = sbr.rel target = $region3
    $region8: #{tpu_custom_call.1} parent=1 // loop_exit
      _
    %431 = vsyncpa [#allocation3], 1
    %s432 = scalar_lea.sflag [#allocation3], 1
    %433 = vsyncpa %s432, 1
    %434 = vsyncpa [#allocation4], 1
    %s435 = scalar_lea.sflag [#allocation4], 1
    %436 = vsyncpa %s435, 1

</llo_original>
